<compile_context>
chip_gen: v7x
topology: tpu7x:2x2x1
jax: 0.10.0
libtpu: 0.0.40
codegen_flags: <defaults>
</compile_context>

<pallas_src>
import jax
import jax.numpy as jnp
from jax.experimental import pallas as pl
from jax.experimental.pallas import tpu as pltpu

NUM_MOVIES = 512      # project constant (lane-aligned for this synthetic kernel)
HIDDEN = 256
ENCODING_SIZE = 32
NORM_EPS = 1e-12      # F.normalize default eps
LEAKY_SLOPE = 0.01    # nn.LeakyReLU default negative_slope


def encoder_kernel(x_ref, w1_ref, b1_ref, w2_ref, b2_ref, o_ref):
    # x tile: (TB, NUM_MOVIES) f32
    x = x_ref[...].astype(jnp.float32)

    # F.normalize(x, p=2, dim=1): x / max(||x||_2, eps).
    # Clamp sq_sum at eps^2 (before rsqrt), then one broadcast multiply.
    # Zero rows stay exactly zero (no NaN), matching F.normalize's clamp.
    sq_sum = jnp.sum(x * x, axis=-1, keepdims=True)           # (TB, 1)
    inv_norm = jax.lax.rsqrt(jnp.maximum(sq_sum, NORM_EPS * NORM_EPS))
    xn = x * inv_norm

    # TODO(synk): Dropout is identity (eval mode); training-mode dropout would
    # use pltpu.prng_seed + pltpu.stateful_bernoulli.

    # Linear(NUM_MOVIES, 256): bf16 MXU inputs, f32 accumulate, f32 bias add.
    h = jnp.dot(xn.astype(jnp.bfloat16), w1_ref[...],
                preferred_element_type=jnp.float32)
    h = h + b1_ref[...]                                       # (TB, 256) + (1, 256)

    # LeakyReLU(negative_slope=0.01): one vmul + vmax.
    h = jnp.maximum(h, LEAKY_SLOPE * h)

    # Linear(256, encoding_size): write the true-width (TB, E) result directly.
    out = jnp.dot(h.astype(jnp.bfloat16), w2_ref[...],
                  preferred_element_type=jnp.float32)
    out = out + b2_ref[...]                                   # (TB, E) + (1, E)

    o_ref[...] = out.astype(o_ref.dtype)


def _round_up(x, m):
    return ((x + m - 1) // m) * m


def encoder_forward(x, w1_t, b1, w2_t, b2, *, tb=1024):
    """x: (B, NUM_MOVIES) f32. w1_t: (NUM_MOVIES, H) bf16, w2_t: (H, E) bf16.
    b1: (1, H) f32, b2: (1, E) f32. Returns (B, E) f32."""
    B, M = x.shape
    H = w1_t.shape[1]
    E = w2_t.shape[1]

    # Batch tiling with NO wrapper-side jnp.pad:
    #   * TB is a multiple of 8; the last tile may be partial (Pallas masks the
    #     out-of-bounds output writes, and all kernel math is row-wise so the
    #     garbage rows of a partial tile never contaminate valid rows).
    #   * If the batch is big enough, cap TB so the grid has >= 2 steps and the
    #     "parallel" axis splits across both TensorCores on v7x.
    B8 = _round_up(B, 8)
    TB = min(tb, B8)
    if B8 > 512 and pl.cdiv(B, TB) < 2:
        TB = _round_up(pl.cdiv(B8, 2), 8)
    grid = (pl.cdiv(B, TB),)

    cost = pl.CostEstimate(
        flops=2 * B * (M * H + H * E),
        transcendentals=B,
        bytes_accessed=(B * M * 4
                        + w1_t.size * w1_t.dtype.itemsize
                        + w2_t.size * w2_t.dtype.itemsize
                        + (H + E) * 4
                        + B * E * 4),
    )

    out = pl.pallas_call(
        encoder_kernel,
        out_shape=jax.ShapeDtypeStruct((B, E), jnp.float32),
        grid=grid,
        in_specs=[
            # x tile changes with the grid step -> pipelined DMA.
            pl.BlockSpec((TB, M), lambda i: (i, 0)),
            # Weights / biases: constant block index -> fetched once, kept resident.
            pl.BlockSpec((M, H), lambda i: (0, 0)),
            pl.BlockSpec((1, H), lambda i: (0, 0)),
            pl.BlockSpec((H, E), lambda i: (0, 0)),   # last dim == full dim (32) is legal
            pl.BlockSpec((1, E), lambda i: (0, 0)),
        ],
        out_specs=pl.BlockSpec((TB, E), lambda i: (i, 0)),
        compiler_params=pltpu.CompilerParams(
            dimension_semantics=("parallel",),     # megacore split on v7x
            vmem_limit_bytes=32 * 1024 * 1024,     # needed for TB=1024+ on v5e default limit
        ),
        cost_estimate=cost,
    )(x, w1_t, b1, w2_t, b2)

    return out


def init_params(key):
    """Deterministic synthetic init matching PyTorch Linear parameter shapes.

    PyTorch stores weight as (out, in); we pre-transpose to (in, out) so the
    kernel computes x @ W + b, and store weights in bf16 (halved DMA, native
    MXU input width). Biases stay f32.
    """
    k1, k2, k3, k4 = jax.random.split(key, 4)
    bound1 = 1.0 / jnp.sqrt(NUM_MOVIES)
    w1 = jax.random.uniform(k1, (HIDDEN, NUM_MOVIES), jnp.float32, -bound1, bound1)
    b1 = jax.random.uniform(k2, (HIDDEN,), jnp.float32, -bound1, bound1)
    bound2 = 1.0 / jnp.sqrt(HIDDEN)
    w2 = jax.random.uniform(k3, (ENCODING_SIZE, HIDDEN), jnp.float32, -bound2, bound2)
    b2 = jax.random.uniform(k4, (ENCODING_SIZE,), jnp.float32, -bound2, bound2)
    return (w1.T.astype(jnp.bfloat16), b1.reshape(1, HIDDEN),
            w2.T.astype(jnp.bfloat16), b2.reshape(1, ENCODING_SIZE))


def reference_forward(x, w1_t, b1, w2_t, b2):
    # Pure-JAX reference with the same bf16 matmul-input casts / f32 accumulation.
    x = x.astype(jnp.float32)
    sq_sum = jnp.sum(x * x, axis=-1, keepdims=True)
    xn = x * jax.lax.rsqrt(jnp.maximum(sq_sum, NORM_EPS * NORM_EPS))
    h = jnp.dot(xn.astype(jnp.bfloat16), w1_t, preferred_element_type=jnp.float32) + b1
    h = jnp.maximum(h, LEAKY_SLOPE * h)
    out = jnp.dot(h.astype(jnp.bfloat16), w2_t, preferred_element_type=jnp.float32) + b2
    return out


if __name__ == "__main__":
    key = jax.random.PRNGKey(0)
    kx, kp = jax.random.split(key)
    w1_t, b1, w2_t, b2 = init_params(kp)

    # (B, tb) cases:
    #   (8, 1024)   -> single tiny tile
    #   (300, 1024) -> single partial tile, B not a multiple of 8, no padding pass
    #   (300, 128)  -> multi-step grid (3 tiles) with a partial last tile
    for B, tb in ((8, 1024), (300, 1024), (300, 128)):
        x = jax.random.normal(jax.random.fold_in(kx, B), (B, NUM_MOVIES), jnp.float32)
        out = jax.block_until_ready(encoder_forward(x, w1_t, b1, w2_t, b2, tb=tb))
        ref = reference_forward(x, w1_t, b1, w2_t, b2)
        assert out.shape == (B, ENCODING_SIZE)
        assert jnp.allclose(out, ref, atol=5e-3, rtol=5e-3), \
            f"mismatch vs reference (B={B}, tb={tb})"

    print("KERNEL_OK")
</pallas_src>

<mosaic_0001>
module attributes {stable_mosaic.version = 11 : i64} {
  func.func @encoder_kernel(%arg0: i32, %arg1: memref<8x512xf32, #tpu.memory_space<vmem>>, %arg2: memref<512x256xbf16, #tpu.memory_space<vmem>>, %arg3: memref<1x256xf32, #tpu.memory_space<vmem>>, %arg4: memref<256x32xbf16, #tpu.memory_space<vmem>>, %arg5: memref<1x32xf32, #tpu.memory_space<vmem>>, %arg6: memref<8x32xf32, #tpu.memory_space<vmem>>) attributes {dimension_semantics = [#tpu.dimension_semantics<parallel>], iteration_bounds = array<i64: 1>, scalar_prefetch = 0 : i64, scratch_operands = 0 : i64, tpu.core_type = #tpu.core_type<tc>, window_params = [{transform_indices = @transform_0, window_bounds = array<i64: 8, 512>}, {pipeline_mode = #tpu.pipeline_mode<synchronous>, transform_indices = @transform_1, window_bounds = array<i64: 512, 256>}, {pipeline_mode = #tpu.pipeline_mode<synchronous>, transform_indices = @transform_2, window_bounds = array<i64: 1, 256>}, {pipeline_mode = #tpu.pipeline_mode<synchronous>, transform_indices = @transform_3, window_bounds = array<i64: 256, 32>}, {pipeline_mode = #tpu.pipeline_mode<synchronous>, transform_indices = @transform_4, window_bounds = array<i64: 1, 32>}, {transform_indices = @transform_5, window_bounds = array<i64: 8, 32>}]} {
    %c0 = arith.constant 0 : index
    %c0_0 = arith.constant 0 : index
    %0 = vector.load %arg1[%c0, %c0_0] : memref<8x512xf32, #tpu.memory_space<vmem>>, vector<8x512xf32>
    %1 = arith.mulf %0, %0 : vector<8x512xf32>
    %cst = arith.constant dense<0.000000e+00> : vector<8xf32>
    %2 = vector.multi_reduction <add>, %1, %cst [1] : vector<8x512xf32> to vector<8xf32>
    %3 = vector.shape_cast %2 : vector<8xf32> to vector<8x1xf32>
    %cst_1 = arith.constant 1.000000e-24 : f32
    %4 = vector.broadcast %cst_1 : f32 to vector<8x1xf32>
    %5 = arith.maximumf %3, %4 : vector<8x1xf32>
    %6 = math.rsqrt %5 : vector<8x1xf32>
    %7 = vector.broadcast %6 : vector<8x1xf32> to vector<8x512xf32>
    %8 = arith.mulf %0, %7 : vector<8x512xf32>
    %9 = arith.truncf %8 : vector<8x512xf32> to vector<8x512xbf16>
    %c0_2 = arith.constant 0 : index
    %c0_3 = arith.constant 0 : index
    %10 = vector.load %arg2[%c0_2, %c0_3] : memref<512x256xbf16, #tpu.memory_space<vmem>>, vector<512x256xbf16>
    %cst_4 = arith.constant dense<0.000000e+00> : vector<8x256xf32>
    %11 = tpu.matmul %9, %10, %cst_4 {dimension_numbers = #tpu.dot_dimension_numbers<[1], [0], [0], [1], [0, 0, 1, 1], [], []>} : vector<8x512xbf16>, vector<512x256xbf16>, vector<8x256xf32> -> vector<8x256xf32>
    %c0_5 = arith.constant 0 : index
    %c0_6 = arith.constant 0 : index
    %12 = vector.load %arg3[%c0_5, %c0_6] : memref<1x256xf32, #tpu.memory_space<vmem>>, vector<1x256xf32>
    %13 = vector.broadcast %12 : vector<1x256xf32> to vector<8x256xf32>
    %14 = arith.addf %11, %13 : vector<8x256xf32>
    %cst_7 = arith.constant 0.00999999977 : f32
    %15 = vector.broadcast %cst_7 : f32 to vector<8x256xf32>
    %16 = arith.mulf %15, %14 : vector<8x256xf32>
    %17 = arith.maximumf %14, %16 : vector<8x256xf32>
    %18 = arith.truncf %17 : vector<8x256xf32> to vector<8x256xbf16>
    %c0_8 = arith.constant 0 : index
    %c0_9 = arith.constant 0 : index
    %19 = vector.load %arg4[%c0_8, %c0_9] : memref<256x32xbf16, #tpu.memory_space<vmem>>, vector<256x32xbf16>
    %cst_10 = arith.constant dense<0.000000e+00> : vector<8x32xf32>
    %20 = tpu.matmul %18, %19, %cst_10 {dimension_numbers = #tpu.dot_dimension_numbers<[1], [0], [0], [1], [0, 0, 1, 1], [], []>} : vector<8x256xbf16>, vector<256x32xbf16>, vector<8x32xf32> -> vector<8x32xf32>
    %c0_11 = arith.constant 0 : index
    %c0_12 = arith.constant 0 : index
    %21 = vector.load %arg5[%c0_11, %c0_12] : memref<1x32xf32, #tpu.memory_space<vmem>>, vector<1x32xf32>
    %22 = vector.broadcast %21 : vector<1x32xf32> to vector<8x32xf32>
    %23 = arith.addf %20, %22 : vector<8x32xf32>
    %c0_13 = arith.constant 0 : index
    %c0_14 = arith.constant 0 : index
    %24 = vector.load %arg6[%c0_13, %c0_14] : memref<8x32xf32, #tpu.memory_space<vmem>>, vector<8x32xf32>
    tpu.vector_store %arg6[%c0_13, %c0_14], %23 {strides = array<i32>} : memref<8x32xf32, #tpu.memory_space<vmem>>, vector<8x32xf32>,
    return
  }
  func.func @transform_0(%arg0: i32) -> (i32, i32) {
    %c0_i32 = arith.constant 0 : i32
    %c0_i32_0 = arith.constant 0 : i32
    return %arg0, %c0_i32 : i32, i32
  }
  func.func @transform_1(%arg0: i32) -> (i32, i32) {
    %c0_i32 = arith.constant 0 : i32
    %c0_i32_0 = arith.constant 0 : i32
    %c0_i32_1 = arith.constant 0 : i32
    return %c0_i32, %c0_i32_0 : i32, i32
  }
  func.func @transform_2(%arg0: i32) -> (i32, i32) {
    %c0_i32 = arith.constant 0 : i32
    %c0_i32_0 = arith.constant 0 : i32
    %c0_i32_1 = arith.constant 0 : i32
    return %c0_i32, %c0_i32_0 : i32, i32
  }
  func.func @transform_3(%arg0: i32) -> (i32, i32) {
    %c0_i32 = arith.constant 0 : i32
    %c0_i32_0 = arith.constant 0 : i32
    %c0_i32_1 = arith.constant 0 : i32
    return %c0_i32, %c0_i32_0 : i32, i32
  }
  func.func @transform_4(%arg0: i32) -> (i32, i32) {
    %c0_i32 = arith.constant 0 : i32
    %c0_i32_0 = arith.constant 0 : i32
    %c0_i32_1 = arith.constant 0 : i32
    return %c0_i32, %c0_i32_0 : i32, i32
  }
  func.func @transform_5(%arg0: i32) -> (i32, i32) {
    %c0_i32 = arith.constant 0 : i32
    %c0_i32_0 = arith.constant 0 : i32
    return %arg0, %c0_i32 : i32, i32
  }
}

</mosaic_0001>

<llo_original>
// kernel: tpu_custom_call.1
$region0: #{tpu_custom_call.1}
  #allocation0 [shape = 'u32[]', space=smem, size = 0x4, offset = 0x4, fixed_abs, tag = 'smem constant byte address 0x4 - core index']
  #allocation1 [shape = 'u32[144,128]{1,0:T(1,128)}', space=vmem, size = 0x12000, scoped, tag = 'internal scratch']
  %s0 = inlined_call_operand.vmem [shape: f32[8,512], index: 0, kind: input, shape index: {}]
  %s1 = inlined_call_operand.hbm [shape: bf16[512,256], index: 1, kind: input, shape index: {}]
  %s2 = inlined_call_operand.vmem [shape: f32[1,256], index: 2, kind: input, shape index: {}]
  %s3 = inlined_call_operand.vmem [shape: bf16[256,32], index: 3, kind: input, shape index: {}]
  %s4 = inlined_call_operand.vmem [shape: f32[1,32], index: 4, kind: input, shape index: {}]
  %s5 = inlined_call_operand.hbm [shape: f32[8,32], index: 5, kind: output, shape index: {}]
  %s6 = sld [smem:[#allocation0]]
  $region34: #{tpu_custom_call.1} parent=0
    _
  %s8 = ssub.s32 1, %s6
  %s9 = scalar_select 0, %s8, %s6
  $region1: #{tpu_custom_call.1} parent=0
    #allocation2 [shape = 'u8[262144]{0}', space=vmem, size = 0x40000, scoped, tag = 'input window, operand 1, single buffered']
    #allocation3 [shape = 's32[1]{0}', space=sflag, size = 0x4, scoped, tag = 'scoped memory for tpu_custom_call.1']
    #allocation4 [shape = 's32[1]{0}', space=sflag, size = 0x4, scoped, tag = 'scoped memory for tpu_custom_call.1']
    #allocation5 [shape = 'u8[4096]{0}', space=vmem, size = 0x1000, scoped, tag = 'output window, operand 0, single buffered']
    %10 = vsyncpa [#allocation3], 0
    %11 = vsyncpa [#allocation4], 0
    // Predicated region
    $region2: #{tpu_custom_call.1} parent=1 // pred_check
      _
    $region3: #{tpu_custom_call.1} parent=1 // pred_check_branch
      %13 = sbr.rel (0) target = $region5
    $region4: #{tpu_custom_call.1} parent=1 // pred_region
      _
    $region5: #{tpu_custom_call.1} parent=1 // pred_fallthru
      _
    // Predicated region
    $region6: #{tpu_custom_call.1} parent=1 // pred_check
      _
    $region7: #{tpu_custom_call.1} parent=1 // pred_check_branch
      %15 = sbr.rel (0) target = $region9
    $region8: #{tpu_custom_call.1} parent=1 // pred_region
      %s17 = ssub.s32 8192, 8192
      %18 = vsyncadd [#allocation3], %s17
      %s19 = sshll.u32 [#allocation2], 4
      %s20 = int_to_ptr.vmem [resolvable:$true] %s19
      %25 = dma.hbm_to_vmem [thread:$0]  %s1, 8192, %s20, [#allocation3], 128, 128, 8
    $region9: #{tpu_custom_call.1} parent=1 // pred_fallthru
      _
    // Predicated region
    $region10: #{tpu_custom_call.1} parent=1 // pred_check
      _
    $region11: #{tpu_custom_call.1} parent=1 // pred_check_branch
      %27 = sbr.rel (0) target = $region13
    $region12: #{tpu_custom_call.1} parent=1 // pred_region
      _
    $region13: #{tpu_custom_call.1} parent=1 // pred_fallthru
      _
    // Predicated region
    $region14: #{tpu_custom_call.1} parent=1 // pred_check
      _
    $region15: #{tpu_custom_call.1} parent=1 // pred_check_branch
      %29 = sbr.rel (0) target = $region17
    $region16: #{tpu_custom_call.1} parent=1 // pred_region
      _
    $region17: #{tpu_custom_call.1} parent=1 // pred_fallthru
      _
    // Predicated region
    $region18: #{tpu_custom_call.1} parent=1 // pred_check
      _
    $region19: #{tpu_custom_call.1} parent=1 // pred_check_branch
      %31 = sbr.rel (0) target = $region21
    $region20: #{tpu_custom_call.1} parent=1 // pred_region
      _
    $region21: #{tpu_custom_call.1} parent=1 // pred_fallthru
      _
    // Predicated region
    $region22: #{tpu_custom_call.1} parent=1 // pred_check
      _
    $region23: #{tpu_custom_call.1} parent=1 // pred_check_branch
      %33 = sbr.rel (0) target = $region25
    $region24: #{tpu_custom_call.1} parent=1 // pred_region
      %34 = dma.done [#allocation3], 8192
    $region25: #{tpu_custom_call.1} parent=1 // pred_fallthru
      _
    %v36 = vld [vmem:[%s0] sm:$0xff]
    %v37 = vld [vmem:[%s0 + $0x8] sm:$0xff]
    %v38 = vld [vmem:[%s0 + $0x10] sm:$0xff]
    %v39 = vld [vmem:[%s0 + $0x18] sm:$0xff]
    %v40 = vmul.f32 %v36, %v36
    %v41 = vmul.f32 %v37, %v37
    %v42 = vmul.f32 %v38, %v38
    %v43 = vmul.f32 %v39, %v39
    %v44 = vadd.f32 %v40, %v41
    %v45 = vadd.f32 %v44, %v42
    %v46 = vadd.f32 %v45, %v43
    %47 = vadd.xlane.f32.xlu0 %v46
    %v48 = vpop.xlane.xlu0 %47
    %v49 = vmax.f32 %v48, 1e-24
    %v50 = vrsqrt.pop %v49
    %v51 = vmul.f32 %v36, %v50
    %v52 = vmul.f32 %v37, %v50
    %v53 = vmul.f32 %v38, %v50
    %v54 = vmul.f32 %v39, %v50
    %v55 = vpack.c.bf16 %v51, %v51
    %v56 = vpack.c.bf16 %v52, %v52
    %v57 = vpack.c.bf16 %v53, %v53
    %v58 = vpack.c.bf16 %v54, %v54
    %v59 = vld [vmem:[#allocation2] sm:$0xff]
    %v60 = vld [vmem:[#allocation2 + $0x8] sm:$0xff]
    %v61 = vld [vmem:[#allocation2 + $0x10] sm:$0xff]
    %v62 = vld [vmem:[#allocation2 + $0x18] sm:$0xff]
    %v63 = vld [vmem:[#allocation2 + $0x20] sm:$0xff]
    %v64 = vld [vmem:[#allocation2 + $0x28] sm:$0xff]
    %v65 = vld [vmem:[#allocation2 + $0x30] sm:$0xff]
    %v66 = vld [vmem:[#allocation2 + $0x38] sm:$0xff]
    %v67 = vld [vmem:[#allocation2 + $0x40] sm:$0xff]
    %v68 = vld [vmem:[#allocation2 + $0x48] sm:$0xff]
    %v69 = vld [vmem:[#allocation2 + $0x50] sm:$0xff]
    %v70 = vld [vmem:[#allocation2 + $0x58] sm:$0xff]
    %v71 = vld [vmem:[#allocation2 + $0x60] sm:$0xff]
    %v72 = vld [vmem:[#allocation2 + $0x68] sm:$0xff]
    %v73 = vld [vmem:[#allocation2 + $0x70] sm:$0xff]
    %v74 = vld [vmem:[#allocation2 + $0x78] sm:$0xff]
    %v75 = vld [vmem:[#allocation2 + $0x80] sm:$0xff]
    %v76 = vld [vmem:[#allocation2 + $0x88] sm:$0xff]
    %v77 = vld [vmem:[#allocation2 + $0x90] sm:$0xff]
    %v78 = vld [vmem:[#allocation2 + $0x98] sm:$0xff]
    %v79 = vld [vmem:[#allocation2 + $0xa0] sm:$0xff]
    %v80 = vld [vmem:[#allocation2 + $0xa8] sm:$0xff]
    %v81 = vld [vmem:[#allocation2 + $0xb0] sm:$0xff]
    %v82 = vld [vmem:[#allocation2 + $0xb8] sm:$0xff]
    %v83 = vld [vmem:[#allocation2 + $0xc0] sm:$0xff]
    %v84 = vld [vmem:[#allocation2 + $0xc8] sm:$0xff]
    %v85 = vld [vmem:[#allocation2 + $0xd0] sm:$0xff]
    %v86 = vld [vmem:[#allocation2 + $0xd8] sm:$0xff]
    %v87 = vld [vmem:[#allocation2 + $0xe0] sm:$0xff]
    %v88 = vld [vmem:[#allocation2 + $0xe8] sm:$0xff]
    %v89 = vld [vmem:[#allocation2 + $0xf0] sm:$0xff]
    %v90 = vld [vmem:[#allocation2 + $0xf8] sm:$0xff]
    %v91 = vld [vmem:[#allocation2 + $0x100] sm:$0xff]
    %v92 = vld [vmem:[#allocation2 + $0x108] sm:$0xff]
    %v93 = vld [vmem:[#allocation2 + $0x110] sm:$0xff]
    %v94 = vld [vmem:[#allocation2 + $0x118] sm:$0xff]
    %v95 = vld [vmem:[#allocation2 + $0x120] sm:$0xff]
    %v96 = vld [vmem:[#allocation2 + $0x128] sm:$0xff]
    %v97 = vld [vmem:[#allocation2 + $0x130] sm:$0xff]
    %v98 = vld [vmem:[#allocation2 + $0x138] sm:$0xff]
    %v99 = vld [vmem:[#allocation2 + $0x140] sm:$0xff]
    %v100 = vld [vmem:[#allocation2 + $0x148] sm:$0xff]
    %v101 = vld [vmem:[#allocation2 + $0x150] sm:$0xff]
    %v102 = vld [vmem:[#allocation2 + $0x158] sm:$0xff]
    %v103 = vld [vmem:[#allocation2 + $0x160] sm:$0xff]
    %v104 = vld [vmem:[#allocation2 + $0x168] sm:$0xff]
    %v105 = vld [vmem:[#allocation2 + $0x170] sm:$0xff]
    %v106 = vld [vmem:[#allocation2 + $0x178] sm:$0xff]
    %v107 = vld [vmem:[#allocation2 + $0x180] sm:$0xff]
    %v108 = vld [vmem:[#allocation2 + $0x188] sm:$0xff]
    %v109 = vld [vmem:[#allocation2 + $0x190] sm:$0xff]
    %v110 = vld [vmem:[#allocation2 + $0x198] sm:$0xff]
    %v111 = vld [vmem:[#allocation2 + $0x1a0] sm:$0xff]
    %v112 = vld [vmem:[#allocation2 + $0x1a8] sm:$0xff]
    %v113 = vld [vmem:[#allocation2 + $0x1b0] sm:$0xff]
    %v114 = vld [vmem:[#allocation2 + $0x1b8] sm:$0xff]
    %v115 = vld [vmem:[#allocation2 + $0x1c0] sm:$0xff]
    %v116 = vld [vmem:[#allocation2 + $0x1c8] sm:$0xff]
    %v117 = vld [vmem:[#allocation2 + $0x1d0] sm:$0xff]
    %v118 = vld [vmem:[#allocation2 + $0x1d8] sm:$0xff]
    %v119 = vld [vmem:[#allocation2 + $0x1e0] sm:$0xff]
    %v120 = vld [vmem:[#allocation2 + $0x1e8] sm:$0xff]
    %v121 = vld [vmem:[#allocation2 + $0x1f0] sm:$0xff]
    %v122 = vld [vmem:[#allocation2 + $0x1f8] sm:$0xff]
    %v123 = vld [vmem:[%s2] sm:$0x3]
    %v125 = vlaneseq
    %v126 = vshrl.u32 %v125, 7
    %v127 = vsub.s32 0, %v126
    %v128 = vrot.slane %v123, %v127
    %v129 = vlaneseq
    %v130 = vshrl.u32 %v129, 7
    %v131 = vsub.s32 1, %v130
    %v132 = vrot.slane %v123, %v131
    %v199 = vunpack.c.l.b16 %v59
    %v200 = vunpack.c.h.b16 %v59
    %v201 = vunpack.c.l.b16 %v60
    %v202 = vunpack.c.h.b16 %v60
    %v203 = vunpack.c.l.b16 %v61
    %v204 = vunpack.c.h.b16 %v61
    %v205 = vunpack.c.l.b16 %v62
    %v206 = vunpack.c.h.b16 %v62
    %v207 = vunpack.c.l.b16 %v63
    %v208 = vunpack.c.h.b16 %v63
    %v209 = vunpack.c.l.b16 %v64
    %v210 = vunpack.c.h.b16 %v64
    %v211 = vunpack.c.l.b16 %v65
    %v212 = vunpack.c.h.b16 %v65
    %v213 = vunpack.c.l.b16 %v66
    %v214 = vunpack.c.h.b16 %v66
    %v215 = vunpack.c.l.b16 %v67
    %v216 = vunpack.c.h.b16 %v67
    %v217 = vunpack.c.l.b16 %v68
    %v218 = vunpack.c.h.b16 %v68
    %v219 = vunpack.c.l.b16 %v69
    %v220 = vunpack.c.h.b16 %v69
    %v221 = vunpack.c.l.b16 %v70
    %v222 = vunpack.c.h.b16 %v70
    %v223 = vunpack.c.l.b16 %v71
    %v224 = vunpack.c.h.b16 %v71
    %v225 = vunpack.c.l.b16 %v72
    %v226 = vunpack.c.h.b16 %v72
    %v227 = vunpack.c.l.b16 %v73
    %v228 = vunpack.c.h.b16 %v73
    %v229 = vunpack.c.l.b16 %v74
    %v230 = vunpack.c.h.b16 %v74
    %v231 = vunpack.c.l.b16 %v75
    %v232 = vunpack.c.h.b16 %v75
    %v233 = vunpack.c.l.b16 %v76
    %v234 = vunpack.c.h.b16 %v76
    %v235 = vunpack.c.l.b16 %v77
    %v236 = vunpack.c.h.b16 %v77
    %v237 = vunpack.c.l.b16 %v78
    %v238 = vunpack.c.h.b16 %v78
    %v239 = vunpack.c.l.b16 %v79
    %v240 = vunpack.c.h.b16 %v79
    %v241 = vunpack.c.l.b16 %v80
    %v242 = vunpack.c.h.b16 %v80
    %v243 = vunpack.c.l.b16 %v81
    %v244 = vunpack.c.h.b16 %v81
    %v245 = vunpack.c.l.b16 %v82
    %v246 = vunpack.c.h.b16 %v82
    %v247 = vunpack.c.l.b16 %v83
    %v248 = vunpack.c.h.b16 %v83
    %v249 = vunpack.c.l.b16 %v84
    %v250 = vunpack.c.h.b16 %v84
    %v251 = vunpack.c.l.b16 %v85
    %v252 = vunpack.c.h.b16 %v85
    %v253 = vunpack.c.l.b16 %v86
    %v254 = vunpack.c.h.b16 %v86
    %v255 = vunpack.c.l.b16 %v87
    %v256 = vunpack.c.h.b16 %v87
    %v257 = vunpack.c.l.b16 %v88
    %v258 = vunpack.c.h.b16 %v88
    %v259 = vunpack.c.l.b16 %v89
    %v260 = vunpack.c.h.b16 %v89
    %v261 = vunpack.c.l.b16 %v90
    %v262 = vunpack.c.h.b16 %v90
    %v263 = vunpack.c.l.b16 %v91
    %v264 = vunpack.c.h.b16 %v91
    %v265 = vunpack.c.l.b16 %v92
    %v266 = vunpack.c.h.b16 %v92
    %v267 = vunpack.c.l.b16 %v93
    %v268 = vunpack.c.h.b16 %v93
    %v269 = vunpack.c.l.b16 %v94
    %v270 = vunpack.c.h.b16 %v94
    %v271 = vunpack.c.l.b16 %v95
    %v272 = vunpack.c.h.b16 %v95
    %v273 = vunpack.c.l.b16 %v96
    %v274 = vunpack.c.h.b16 %v96
    %v275 = vunpack.c.l.b16 %v97
    %v276 = vunpack.c.h.b16 %v97
    %v277 = vunpack.c.l.b16 %v98
    %v278 = vunpack.c.h.b16 %v98
    %v279 = vunpack.c.l.b16 %v99
    %v280 = vunpack.c.h.b16 %v99
    %v281 = vunpack.c.l.b16 %v100
    %v282 = vunpack.c.h.b16 %v100
    %v283 = vunpack.c.l.b16 %v101
    %v284 = vunpack.c.h.b16 %v101
    %v285 = vunpack.c.l.b16 %v102
    %v286 = vunpack.c.h.b16 %v102
    %v287 = vunpack.c.l.b16 %v103
    %v288 = vunpack.c.h.b16 %v103
    %v289 = vunpack.c.l.b16 %v104
    %v290 = vunpack.c.h.b16 %v104
    %v291 = vunpack.c.l.b16 %v105
    %v292 = vunpack.c.h.b16 %v105
    %v293 = vunpack.c.l.b16 %v106
    %v294 = vunpack.c.h.b16 %v106
    %v295 = vunpack.c.l.b16 %v107
    %v296 = vunpack.c.h.b16 %v107
    %v297 = vunpack.c.l.b16 %v108
    %v298 = vunpack.c.h.b16 %v108
    %v299 = vunpack.c.l.b16 %v109
    %v300 = vunpack.c.h.b16 %v109
    %v301 = vunpack.c.l.b16 %v110
    %v302 = vunpack.c.h.b16 %v110
    %v303 = vunpack.c.l.b16 %v111
    %v304 = vunpack.c.h.b16 %v111
    %v305 = vunpack.c.l.b16 %v112
    %v306 = vunpack.c.h.b16 %v112
    %v307 = vunpack.c.l.b16 %v113
    %v308 = vunpack.c.h.b16 %v113
    %v309 = vunpack.c.l.b16 %v114
    %v310 = vunpack.c.h.b16 %v114
    %v311 = vunpack.c.l.b16 %v115
    %v312 = vunpack.c.h.b16 %v115
    %v313 = vunpack.c.l.b16 %v116
    %v314 = vunpack.c.h.b16 %v116
    %v315 = vunpack.c.l.b16 %v117
    %v316 = vunpack.c.h.b16 %v117
    %v317 = vunpack.c.l.b16 %v118
    %v318 = vunpack.c.h.b16 %v118
    %v319 = vunpack.c.l.b16 %v119
    %v320 = vunpack.c.h.b16 %v119
    %v321 = vunpack.c.l.b16 %v120
    %v322 = vunpack.c.h.b16 %v120
    %v323 = vunpack.c.l.b16 %v121
    %v324 = vunpack.c.h.b16 %v121
    %v325 = vunpack.c.l.b16 %v122
    %v326 = vunpack.c.h.b16 %v122
    %v327 = vpack.c.b16 %v201, %v199
    %v328 = vpack.c.b16 %v202, %v200
    %v329 = vpack.c.b16 %v205, %v203
    %v330 = vpack.c.b16 %v206, %v204
    %v331 = vpack.c.b16 %v209, %v207
    %v332 = vpack.c.b16 %v210, %v208
    %v333 = vpack.c.b16 %v213, %v211
    %v334 = vpack.c.b16 %v214, %v212
    %v335 = vpack.c.b16 %v217, %v215
    %v336 = vpack.c.b16 %v218, %v216
    %v337 = vpack.c.b16 %v221, %v219
    %v338 = vpack.c.b16 %v222, %v220
    %v339 = vpack.c.b16 %v225, %v223
    %v340 = vpack.c.b16 %v226, %v224
    %v341 = vpack.c.b16 %v229, %v227
    %v342 = vpack.c.b16 %v230, %v228
    %v343 = vpack.c.b16 %v233, %v231
    %v344 = vpack.c.b16 %v234, %v232
    %v345 = vpack.c.b16 %v237, %v235
    %v346 = vpack.c.b16 %v238, %v236
    %v347 = vpack.c.b16 %v241, %v239
    %v348 = vpack.c.b16 %v242, %v240
    %v349 = vpack.c.b16 %v245, %v243
    %v350 = vpack.c.b16 %v246, %v244
    %v351 = vpack.c.b16 %v249, %v247
    %v352 = vpack.c.b16 %v250, %v248
    %v353 = vpack.c.b16 %v253, %v251
    %v354 = vpack.c.b16 %v254, %v252
    %v355 = vpack.c.b16 %v257, %v255
    %v356 = vpack.c.b16 %v258, %v256
    %v357 = vpack.c.b16 %v261, %v259
    %v358 = vpack.c.b16 %v262, %v260
    %v359 = vpack.c.b16 %v265, %v263
    %v360 = vpack.c.b16 %v266, %v264
    %v361 = vpack.c.b16 %v269, %v267
    %v362 = vpack.c.b16 %v270, %v268
    %v363 = vpack.c.b16 %v273, %v271
    %v364 = vpack.c.b16 %v274, %v272
    %v365 = vpack.c.b16 %v277, %v275
    %v366 = vpack.c.b16 %v278, %v276
    %v367 = vpack.c.b16 %v281, %v279
    %v368 = vpack.c.b16 %v282, %v280
    %v369 = vpack.c.b16 %v285, %v283
    %v370 = vpack.c.b16 %v286, %v284
    %v371 = vpack.c.b16 %v289, %v287
    %v372 = vpack.c.b16 %v290, %v288
    %v373 = vpack.c.b16 %v293, %v291
    %v374 = vpack.c.b16 %v294, %v292
    %v375 = vpack.c.b16 %v297, %v295
    %v376 = vpack.c.b16 %v298, %v296
    %v377 = vpack.c.b16 %v301, %v299
    %v378 = vpack.c.b16 %v302, %v300
    %v379 = vpack.c.b16 %v305, %v303
    %v380 = vpack.c.b16 %v306, %v304
    %v381 = vpack.c.b16 %v309, %v307
    %v382 = vpack.c.b16 %v310, %v308
    %v383 = vpack.c.b16 %v313, %v311
    %v384 = vpack.c.b16 %v314, %v312
    %v385 = vpack.c.b16 %v317, %v315
    %v386 = vpack.c.b16 %v318, %v316
    %v387 = vpack.c.b16 %v321, %v319
    %v388 = vpack.c.b16 %v322, %v320
    %v389 = vpack.c.b16 %v325, %v323
    %v390 = vpack.c.b16 %v326, %v324
    %455 = vmatprep.subr.bf16.mxu0 %v328
    %456 = vmatpush1.bf16.msra.mxu0 %v327
    %457 = vmatprep.subr.bf16.mxu0 %v330
    %458 = vmatpush1.bf16.msra.mxu0 %v329
    %459 = vmatprep.subr.bf16.mxu0 %v332
    %460 = vmatpush1.bf16.msra.mxu0 %v331
    %461 = vmatprep.subr.bf16.mxu0 %v334
    %462 = vmatpush1.bf16.msra.mxu0 %v333
    %463 = vmatprep.subr.bf16.mxu0 %v336
    %464 = vmatpush1.bf16.msra.mxu0 %v335
    %465 = vmatprep.subr.bf16.mxu0 %v338
    %466 = vmatpush1.bf16.msra.mxu0 %v337
    %467 = vmatprep.subr.bf16.mxu0 %v340
    %468 = vmatpush1.bf16.msra.mxu0 %v339
    %469 = vmatprep.subr.bf16.mxu0 %v342
    %470 = vmatpush1.bf16.msra.mxu0 %v341
    %471 = vmatprep.subr.bf16.mxu0 %v344
    %472 = vmatpush1.bf16.msra.mxu0 %v343
    %473 = vmatprep.subr.bf16.mxu0 %v346
    %474 = vmatpush1.bf16.msra.mxu0 %v345
    %475 = vmatprep.subr.bf16.mxu0 %v348
    %476 = vmatpush1.bf16.msra.mxu0 %v347
    %477 = vmatprep.subr.bf16.mxu0 %v350
    %478 = vmatpush1.bf16.msra.mxu0 %v349
    %479 = vmatprep.subr.bf16.mxu0 %v352
    %480 = vmatpush1.bf16.msra.mxu0 %v351
    %481 = vmatprep.subr.bf16.mxu0 %v354
    %482 = vmatpush1.bf16.msra.mxu0 %v353
    %483 = vmatprep.subr.bf16.mxu0 %v356
    %484 = vmatpush1.bf16.msra.mxu0 %v355
    %485 = vmatprep.subr.bf16.mxu0 %v358
    %486 = vmatpush1.bf16.msra.mxu0 %v357
    %487 = vmatprep.mubr.bf16.mxu0 %v56
    %488 = vmatmul.mubr.bf16.gmra.mrb[0].mxu0 %v55
    %v489 = vpop.f32.mrb[0].mxu0
    %v490 = vadd.f32 %v128, %v489
    %v491 = vpop.f32.mrb[0].mxu0
    %v492 = vadd.f32 %v132, %v491
    %v493 = vpop.f32.mrb[0].mxu0
    %v494 = vpop.f32.mrb[0].mxu0
    %495 = vdwg.mxu0
    %496 = vmatprep.subr.bf16.mxu0 %v360
    %497 = vmatpush1.bf16.msra.mxu0 %v359
    %498 = vmatprep.subr.bf16.mxu0 %v362
    %499 = vmatpush1.bf16.msra.mxu0 %v361
    %500 = vmatprep.subr.bf16.mxu0 %v364
    %501 = vmatpush1.bf16.msra.mxu0 %v363
    %502 = vmatprep.subr.bf16.mxu0 %v366
    %503 = vmatpush1.bf16.msra.mxu0 %v365
    %504 = vmatprep.subr.bf16.mxu0 %v368
    %505 = vmatpush1.bf16.msra.mxu0 %v367
    %506 = vmatprep.subr.bf16.mxu0 %v370
    %507 = vmatpush1.bf16.msra.mxu0 %v369
    %508 = vmatprep.subr.bf16.mxu0 %v372
    %509 = vmatpush1.bf16.msra.mxu0 %v371
    %510 = vmatprep.subr.bf16.mxu0 %v374
    %511 = vmatpush1.bf16.msra.mxu0 %v373
    %512 = vmatprep.subr.bf16.mxu0 %v376
    %513 = vmatpush1.bf16.msra.mxu0 %v375
    %514 = vmatprep.subr.bf16.mxu0 %v378
    %515 = vmatpush1.bf16.msra.mxu0 %v377
    %516 = vmatprep.subr.bf16.mxu0 %v380
    %517 = vmatpush1.bf16.msra.mxu0 %v379
    %518 = vmatprep.subr.bf16.mxu0 %v382
    %519 = vmatpush1.bf16.msra.mxu0 %v381
    %520 = vmatprep.subr.bf16.mxu0 %v384
    %521 = vmatpush1.bf16.msra.mxu0 %v383
    %522 = vmatprep.subr.bf16.mxu0 %v386
    %523 = vmatpush1.bf16.msra.mxu0 %v385
    %524 = vmatprep.subr.bf16.mxu0 %v388
    %525 = vmatpush1.bf16.msra.mxu0 %v387
    %526 = vmatprep.subr.bf16.mxu0 %v390
    %527 = vmatpush1.bf16.msra.mxu0 %v389
    %528 = vmatprep.mubr.bf16.mxu0 %v58
    %529 = vmatmul.mubr.bf16.gmra.mrb[0].mxu0 %v57
    %v530 = vpop.f32.mrb[0].mxu0
    %v531 = vadd.f32 %v490, %v530
    %v532 = vpop.f32.mrb[0].mxu0
    %v533 = vadd.f32 %v492, %v532
    %v534 = vpop.f32.mrb[0].mxu0
    %v535 = vpop.f32.mrb[0].mxu0
    %536 = vdwg.mxu0
    %v537 = vmul.f32 %v531, 0.01
    %v538 = vmul.f32 %v533, 0.01
    %v539 = vmax.f32 %v531, %v537
    %v540 = vmax.f32 %v533, %v538
    %v541 = vpack.c.bf16 %v539, %v539
    %v542 = vpack.c.bf16 %v540, %v540
    %v543 = vld [vmem:[%s3] sm:$0xf]
    %v544 = vld [vmem:[%s3 + $0x4] sm:$0xf]
    %v545 = vld [vmem:[%s3 + $0x8] sm:$0xf]
    %v546 = vld [vmem:[%s3 + $0xc] sm:$0xf]
    %v547 = vld [vmem:[%s3 + $0x10] sm:$0xf]
    %v548 = vld [vmem:[%s3 + $0x14] sm:$0xf]
    %v549 = vld [vmem:[%s3 + $0x18] sm:$0xf]
    %v550 = vld [vmem:[%s3 + $0x1c] sm:$0xf]
    %v551 = vld [vmem:[%s3 + $0x20] sm:$0xf]
    %v552 = vld [vmem:[%s3 + $0x24] sm:$0xf]
    %v553 = vld [vmem:[%s3 + $0x28] sm:$0xf]
    %v554 = vld [vmem:[%s3 + $0x2c] sm:$0xf]
    %v555 = vld [vmem:[%s3 + $0x30] sm:$0xf]
    %v556 = vld [vmem:[%s3 + $0x34] sm:$0xf]
    %v557 = vld [vmem:[%s3 + $0x38] sm:$0xf]
    %v558 = vld [vmem:[%s3 + $0x3c] sm:$0xf]
    %v559 = vld [vmem:[%s3 + $0x40] sm:$0xf]
    %v560 = vld [vmem:[%s3 + $0x44] sm:$0xf]
    %v561 = vld [vmem:[%s3 + $0x48] sm:$0xf]
    %v562 = vld [vmem:[%s3 + $0x4c] sm:$0xf]
    %v563 = vld [vmem:[%s3 + $0x50] sm:$0xf]
    %v564 = vld [vmem:[%s3 + $0x54] sm:$0xf]
    %v565 = vld [vmem:[%s3 + $0x58] sm:$0xf]
    %v566 = vld [vmem:[%s3 + $0x5c] sm:$0xf]
    %v567 = vld [vmem:[%s3 + $0x60] sm:$0xf]
    %v568 = vld [vmem:[%s3 + $0x64] sm:$0xf]
    %v569 = vld [vmem:[%s3 + $0x68] sm:$0xf]
    %v570 = vld [vmem:[%s3 + $0x6c] sm:$0xf]
    %v571 = vld [vmem:[%s3 + $0x70] sm:$0xf]
    %v572 = vld [vmem:[%s3 + $0x74] sm:$0xf]
    %v573 = vld [vmem:[%s3 + $0x78] sm:$0xf]
    %v574 = vld [vmem:[%s3 + $0x7c] sm:$0xf]
    %v575 = vld [vmem:[%s4] sm:$0x1]
    %v577 = vlaneseq
    %v578 = vshrl.u32 %v577, 7
    %v579 = vsub.s32 0, %v578
    %v580 = vrot.slane %v575, %v579
    %v614 = vunpack.c.l.b16 %v543
    %v615 = vunpack.c.l.b16 %v544
    %v616 = vunpack.c.l.b16 %v545
    %v617 = vunpack.c.l.b16 %v546
    %v618 = vunpack.c.l.b16 %v547
    %v619 = vunpack.c.l.b16 %v548
    %v620 = vunpack.c.l.b16 %v549
    %v621 = vunpack.c.l.b16 %v550
    %v622 = vunpack.c.l.b16 %v551
    %v623 = vunpack.c.l.b16 %v552
    %v624 = vunpack.c.l.b16 %v553
    %v625 = vunpack.c.l.b16 %v554
    %v626 = vunpack.c.l.b16 %v555
    %v627 = vunpack.c.l.b16 %v556
    %v628 = vunpack.c.l.b16 %v557
    %v629 = vunpack.c.l.b16 %v558
    %v630 = vunpack.c.l.b16 %v559
    %v631 = vunpack.c.l.b16 %v560
    %v632 = vunpack.c.l.b16 %v561
    %v633 = vunpack.c.l.b16 %v562
    %v634 = vunpack.c.l.b16 %v563
    %v635 = vunpack.c.l.b16 %v564
    %v636 = vunpack.c.l.b16 %v565
    %v637 = vunpack.c.l.b16 %v566
    %v638 = vunpack.c.l.b16 %v567
    %v639 = vunpack.c.l.b16 %v568
    %v640 = vunpack.c.l.b16 %v569
    %v641 = vunpack.c.l.b16 %v570
    %v642 = vunpack.c.l.b16 %v571
    %v643 = vunpack.c.l.b16 %v572
    %v644 = vunpack.c.l.b16 %v573
    %v645 = vunpack.c.l.b16 %v574
    %v646 = vpack.c.b16 %v615, %v614
    %v647 = vpack.c.b16 %v617, %v616
    %v648 = vpack.c.b16 %v619, %v618
    %v649 = vpack.c.b16 %v621, %v620
    %v650 = vpack.c.b16 %v623, %v622
    %v651 = vpack.c.b16 %v625, %v624
    %v652 = vpack.c.b16 %v627, %v626
    %v653 = vpack.c.b16 %v629, %v628
    %v654 = vpack.c.b16 %v631, %v630
    %v655 = vpack.c.b16 %v633, %v632
    %v656 = vpack.c.b16 %v635, %v634
    %v657 = vpack.c.b16 %v637, %v636
    %v658 = vpack.c.b16 %v639, %v638
    %v659 = vpack.c.b16 %v641, %v640
    %v660 = vpack.c.b16 %v643, %v642
    %v661 = vpack.c.b16 %v645, %v644
    %678 = vmatprep.subr.bf16.mxu0 0
    %679 = vmatpush1.bf16.msra.mxu0 %v646
    %680 = vmatprep.subr.bf16.mxu0 0
    %681 = vmatpush1.bf16.msra.mxu0 %v647
    %682 = vmatprep.subr.bf16.mxu0 0
    %683 = vmatpush1.bf16.msra.mxu0 %v648
    %684 = vmatprep.subr.bf16.mxu0 0
    %685 = vmatpush1.bf16.msra.mxu0 %v649
    %686 = vmatprep.subr.bf16.mxu0 0
    %687 = vmatpush1.bf16.msra.mxu0 %v650
    %688 = vmatprep.subr.bf16.mxu0 0
    %689 = vmatpush1.bf16.msra.mxu0 %v651
    %690 = vmatprep.subr.bf16.mxu0 0
    %691 = vmatpush1.bf16.msra.mxu0 %v652
    %692 = vmatprep.subr.bf16.mxu0 0
    %693 = vmatpush1.bf16.msra.mxu0 %v653
    %694 = vmatprep.subr.bf16.mxu0 0
    %695 = vmatpush1.bf16.msra.mxu0 %v654
    %696 = vmatprep.subr.bf16.mxu0 0
    %697 = vmatpush1.bf16.msra.mxu0 %v655
    %698 = vmatprep.subr.bf16.mxu0 0
    %699 = vmatpush1.bf16.msra.mxu0 %v656
    %700 = vmatprep.subr.bf16.mxu0 0
    %701 = vmatpush1.bf16.msra.mxu0 %v657
    %702 = vmatprep.subr.bf16.mxu0 0
    %703 = vmatpush1.bf16.msra.mxu0 %v658
    %704 = vmatprep.subr.bf16.mxu0 0
    %705 = vmatpush1.bf16.msra.mxu0 %v659
    %706 = vmatprep.subr.bf16.mxu0 0
    %707 = vmatpush1.bf16.msra.mxu0 %v660
    %708 = vmatprep.subr.bf16.mxu0 0
    %709 = vmatpush1.bf16.msra.mxu0 %v661
    %710 = vmatprep.mubr.bf16.mxu0 %v542
    %711 = vmatmul.mubr.bf16.gmra.mrb[0].mxu0 %v541
    %v712 = vpop.f32.mrb[0].mxu0
    %v713 = vadd.f32 %v580, %v712
    %v714 = vpop.f32.mrb[0].mxu0
    %v715 = vpop.f32.mrb[0].mxu0
    %v716 = vpop.f32.mrb[0].mxu0
    %717 = vdwg.mxu0
    %vm718 = vcmask 261120
    %719 = vst.msk [vmem:[#allocation5] sm:$0xff] %vm718, %v713
    // Predicated region
    $region26: #{tpu_custom_call.1} parent=1 // pred_check
      _
    $region27: #{tpu_custom_call.1} parent=1 // pred_check_branch
      %721 = sbr.rel (0) target = $region29
    $region28: #{tpu_custom_call.1} parent=1 // pred_region
      %s723 = ssub.s32 128, 128
      %724 = vsyncadd [#allocation4], %s723
      %s726 = sshll.u32 [#allocation5], 4
      %s727 = int_to_ptr.vmem [resolvable:$true] %s726
      %729 = dma.vmem_to_hbm [thread:$0]  %s727, 128, %s5, [#allocation4]
    $region29: #{tpu_custom_call.1} parent=1 // pred_fallthru
      _
    // Predicated region
    $region30: #{tpu_custom_call.1} parent=1 // pred_check
      _
    $region31: #{tpu_custom_call.1} parent=1 // pred_check_branch
      %731 = sbr.rel (0) target = $region33
    $region32: #{tpu_custom_call.1} parent=1 // pred_region
      %732 = dma.done [#allocation4], 128
    $region33: #{tpu_custom_call.1} parent=1 // pred_fallthru
      _
    %733 = vsyncpa [#allocation3], 1
    %734 = vsyncpa [#allocation4], 1

</llo_original>
